<compile_context>
chip_gen: v7x
topology: tpu7x:2x2x1
jax: 0.10.0
libtpu: 0.0.40
codegen_flags: <defaults>
</compile_context>

<pallas_src>
import jax
import jax.numpy as jnp
from jax import lax
from jax.experimental import pallas as pl
from jax.experimental.pallas import tpu as pltpu


def _round_up(x, m):
    return ((x + m - 1) // m) * m


def _pick_tile(dim, candidates):
    for c in candidates:
        if dim >= c and dim % c == 0:
            return c
    return dim


# ----------------------------------------------------------------------------
# Parallel GEMM + bias kernel (hoisted input projection + vocab projection).
# Both grid axes are fully parallel (megacore-friendly).
# ----------------------------------------------------------------------------
def _matmul_bias_kernel(x_ref, w_ref, b_ref, o_ref):
    o_ref[...] = (jnp.dot(x_ref[...], w_ref[...],
                          preferred_element_type=jnp.float32)
                  + b_ref[...]).astype(o_ref.dtype)


def _matmul_bias(x, w, b, *, out_dtype=jnp.float32):
    """x: (M, K), w: (K, N), b: (N,) -> (M, N).  M must be a multiple of 8."""
    M, K = x.shape
    N = w.shape[1]
    tm = _pick_tile(M, (512, 256, 128, 64, 32, 16, 8))
    tn = _pick_tile(N, (512, 256, 128))   # lane-dense output tiles; caps weight VMEM
    grid = (M // tm, N // tn)

    return pl.pallas_call(
        _matmul_bias_kernel,
        out_shape=jax.ShapeDtypeStruct((M, N), out_dtype),
        grid_spec=pltpu.PrefetchScalarGridSpec(
            num_scalar_prefetch=0,
            grid=grid,
            in_specs=[
                pl.BlockSpec((tm, K), lambda i, j: (i, 0)),
                pl.BlockSpec((K, tn), lambda i, j: (0, j)),
                pl.BlockSpec((1, tn), lambda i, j: (0, j)),
            ],
            out_specs=pl.BlockSpec((tm, tn), lambda i, j: (i, j)),
        ),
        compiler_params=pltpu.CompilerParams(
            dimension_semantics=("parallel", "parallel"),
            vmem_limit_bytes=64 * 1024 * 1024),
    )(x, w, b.reshape(1, N))


# ----------------------------------------------------------------------------
# Sequential LSTM recurrence kernel.  One grid step == TB timesteps.
# Only the hidden-to-hidden work; the input projection is precomputed.
# ----------------------------------------------------------------------------
def _lstm_recurrence_kernel(xp_ref,   # (Bp, TB, 4, H)  precomputed x@W_ih^T + bias
                            h0_ref,   # (Bp, H)         initial hidden (image features)
                            whh_ref,  # (4, H, H)       per-gate W_hh^T
                            hs_ref,   # (Bp, TB, H)     hidden states out (batch-first)
                            h_sc,     # (Bp, H) f32     hidden state scratch
                            c_sc):    # (Bp, H) f32     cell state scratch
    @pl.when(pl.program_id(0) == 0)
    def _():
        h_sc[...] = h0_ref[...].astype(jnp.float32)
        c_sc[...] = jnp.zeros_like(c_sc)

    xp = xp_ref[...].astype(jnp.float32)     # load the whole time-chunk once
    whh = whh_ref[...].astype(jnp.float32)
    tb = xp.shape[1]

    # Statically unrolled inner time loop (TB is a small compile-time constant).
    for lt in range(tb):
        x_t = xp[:, lt]                      # (Bp, 4, H), gate axis leading
        h_prev = h_sc[...]
        c_prev = c_sc[...]

        pre = [x_t[:, g, :]
               + jnp.dot(h_prev, whh[g], preferred_element_type=jnp.float32)
               for g in range(4)]            # PyTorch gate order: i, f, g, o

        i_g = 0.5 * jnp.tanh(0.5 * pre[0]) + 0.5   # sigmoid via single EUP tanh
        f_g = 0.5 * jnp.tanh(0.5 * pre[1]) + 0.5
        g_g = jnp.tanh(pre[2])
        o_g = 0.5 * jnp.tanh(0.5 * pre[3]) + 0.5

        c_new = f_g * c_prev + i_g * g_g
        h_new = o_g * jnp.tanh(c_new)

        c_sc[...] = c_new
        h_sc[...] = h_new
        hs_ref[:, lt, :] = h_new.astype(hs_ref.dtype)


# ----------------------------------------------------------------------------
# Wrapper: DecoderRNN.forward
# ----------------------------------------------------------------------------
def decoder_rnn_pallas(features, captions, params, *, time_block=8):
    """features: (B, H) f32, captions: (B, T) int32 -> logits (B, T, V) f32."""
    w_embed = params["w_embed"]      # (V, E)
    w_ih = params["w_ih"]            # (4H, E)
    w_hh = params["w_hh"]            # (4H, H)
    b_ih = params["b_ih"]            # (4H,)
    b_hh = params["b_hh"]            # (4H,)
    w_lin = params["w_lin"]          # (V, H)
    b_lin = params["b_lin"]          # (V,)

    B, T = captions.shape
    V, E = w_embed.shape
    H = w_hh.shape[1]

    # Pad batch to a multiple of 8 (sublanes) and time to a multiple of TB.
    Bp = _round_up(B, 8)
    TB = time_block
    Tp = _round_up(T, TB)
    captions_p = jnp.zeros((Bp, Tp), captions.dtype).at[:B, :T].set(captions)
    features_p = jnp.zeros((Bp, H), features.dtype).at[:B].set(features)

    # Embedding gather (XLA glue).
    emb = jnp.take(w_embed, captions_p, axis=0)              # (Bp, Tp, E)

    # Hoisted input projection: one big parallel GEMM over M = Bp*Tp rows.
    wih_t = jnp.transpose(w_ih)                              # (E, 4H)
    bias = b_ih + b_hh                                       # (4H,)
    x_proj = _matmul_bias(emb.reshape(Bp * Tp, E), wih_t, bias)   # (Bp*Tp, 4H)
    x_proj = x_proj.reshape(Bp, Tp, 4, H)                    # gate axis leading H

    # Per-gate W_hh^T: (4, H, H).
    whh_g = jnp.transpose(w_hh.reshape(4, H, H), (0, 2, 1))

    # Sequential recurrence kernel (time-blocked grid, batch-first hidden out).
    hs = pl.pallas_call(
        _lstm_recurrence_kernel,
        out_shape=jax.ShapeDtypeStruct((Bp, Tp, H), jnp.float32),
        grid_spec=pltpu.PrefetchScalarGridSpec(
            num_scalar_prefetch=0,
            grid=(Tp // TB,),
            in_specs=[
                pl.BlockSpec((Bp, TB, 4, H), lambda t: (0, t, 0, 0)),
                pl.BlockSpec((Bp, H), lambda t: (0, 0)),
                pl.BlockSpec((4, H, H), lambda t: (0, 0, 0)),
            ],
            out_specs=pl.BlockSpec((Bp, TB, H), lambda t: (0, t, 0)),
            scratch_shapes=[
                pltpu.VMEM((Bp, H), jnp.float32),   # h state
                pltpu.VMEM((Bp, H), jnp.float32),   # c state
            ],
        ),
        compiler_params=pltpu.CompilerParams(
            dimension_semantics=("arbitrary",)),    # true sequential recurrence
    )(x_proj, features_p, whh_g)

    # Decoupled vocab projection: big parallel GEMM tiled over (M, Vp).
    # Pad vocab to a multiple of 128 so the logits output tiles are lane-dense.
    Vp = _round_up(V, 128)
    wlin_t = jnp.zeros((H, Vp), w_lin.dtype).at[:, :V].set(jnp.transpose(w_lin))
    blin_p = jnp.zeros((Vp,), b_lin.dtype).at[:V].set(b_lin)
    logits = _matmul_bias(hs.reshape(Bp * Tp, H), wlin_t, blin_p)     # (Bp*Tp, Vp)
    logits = logits.reshape(Bp, Tp, Vp)

    return logits[:B, :T, :V]                                # (B, T, V) batch_first


# ----------------------------------------------------------------------------
# Pure-JAX reference (mirrors torch.nn.LSTM semantics, gate order i,f,g,o)
# ----------------------------------------------------------------------------
def decoder_rnn_ref(features, captions, params):
    w_embed = params["w_embed"]
    w_ih, w_hh = params["w_ih"], params["w_hh"]
    b_ih, b_hh = params["b_ih"], params["b_hh"]
    w_lin, b_lin = params["w_lin"], params["b_lin"]
    H = w_hh.shape[1]

    emb = jnp.take(w_embed, captions, axis=0)        # (B, T, E)
    emb_t = jnp.transpose(emb, (1, 0, 2))            # (T, B, E)

    def step(carry, x_t):
        h, c = carry
        gates = x_t @ w_ih.T + h @ w_hh.T + b_ih + b_hh
        i = jax.nn.sigmoid(gates[:, 0 * H:1 * H])
        f = jax.nn.sigmoid(gates[:, 1 * H:2 * H])
        g = jnp.tanh(gates[:, 2 * H:3 * H])
        o = jax.nn.sigmoid(gates[:, 3 * H:4 * H])
        c_new = f * c + i * g
        h_new = o * jnp.tanh(c_new)
        return (h_new, c_new), h_new

    h0 = features
    c0 = jnp.zeros_like(h0)
    _, hs = lax.scan(step, (h0, c0), emb_t)          # (T, B, H)
    out = hs @ w_lin.T + b_lin                       # (T, B, V)
    return jnp.transpose(out, (1, 0, 2))             # (B, T, V)


# ----------------------------------------------------------------------------
# Main
# ----------------------------------------------------------------------------
if __name__ == "__main__":
    embed_size = 32
    hidden_size = 32
    vocab_size = 128
    batch = 2
    seq_len = 8

    key = jax.random.PRNGKey(0)
    keys = jax.random.split(key, 9)

    scale = 0.1
    params = {
        "w_embed": scale * jax.random.normal(keys[0], (vocab_size, embed_size), jnp.float32),
        "w_ih":    scale * jax.random.normal(keys[1], (4 * hidden_size, embed_size), jnp.float32),
        "w_hh":    scale * jax.random.normal(keys[2], (4 * hidden_size, hidden_size), jnp.float32),
        "b_ih":    scale * jax.random.normal(keys[3], (4 * hidden_size,), jnp.float32),
        "b_hh":    scale * jax.random.normal(keys[4], (4 * hidden_size,), jnp.float32),
        "w_lin":   scale * jax.random.normal(keys[5], (vocab_size, hidden_size), jnp.float32),
        "b_lin":   scale * jax.random.normal(keys[6], (vocab_size,), jnp.float32),
    }

    features = jax.random.normal(keys[7], (batch, hidden_size), jnp.float32)
    captions = jax.random.randint(keys[8], (batch, seq_len), 0, vocab_size, jnp.int32)

    out = decoder_rnn_pallas(features, captions, params)
    out = jax.block_until_ready(out)

    ref = decoder_rnn_ref(features, captions, params)
    assert out.shape == (batch, seq_len, vocab_size)
    assert jnp.allclose(out, ref, atol=1e-4, rtol=1e-4), "mismatch vs reference"

    print("KERNEL_OK")
</pallas_src>

<mosaic_0001>
module attributes {stable_mosaic.version = 11 : i64} {
  func.func @_matmul_bias_kernel(%arg0: i32, %arg1: i32, %arg2: memref<64x32xf32, #tpu.memory_space<vmem>>, %arg3: memref<32x128xf32, #tpu.memory_space<vmem>>, %arg4: memref<1x128xf32, #tpu.memory_space<vmem>>, %arg5: memref<64x128xf32, #tpu.memory_space<vmem>>) attributes {dimension_semantics = [#tpu.dimension_semantics<parallel>, #tpu.dimension_semantics<parallel>], iteration_bounds = array<i64: 1, 1>, scalar_prefetch = 0 : i64, scratch_operands = 0 : i64, tpu.core_type = #tpu.core_type<tc>, window_params = [{transform_indices = @transform_0, window_bounds = array<i64: 64, 32>}, {transform_indices = @transform_1, window_bounds = array<i64: 32, 128>}, {transform_indices = @transform_2, window_bounds = array<i64: 1, 128>}, {transform_indices = @transform_3, window_bounds = array<i64: 64, 128>}]} {
    %c0 = arith.constant 0 : index
    %c0_0 = arith.constant 0 : index
    %0 = vector.load %arg2[%c0, %c0_0] : memref<64x32xf32, #tpu.memory_space<vmem>>, vector<64x32xf32>
    %c0_1 = arith.constant 0 : index
    %c0_2 = arith.constant 0 : index
    %1 = vector.load %arg3[%c0_1, %c0_2] : memref<32x128xf32, #tpu.memory_space<vmem>>, vector<32x128xf32>
    %cst = arith.constant dense<0.000000e+00> : vector<64x128xf32>
    %2 = tpu.matmul %0, %1, %cst {dimension_numbers = #tpu.dot_dimension_numbers<[1], [0], [0], [1], [0, 0, 1, 1], [], []>} : vector<64x32xf32>, vector<32x128xf32>, vector<64x128xf32> -> vector<64x128xf32>
    %c0_3 = arith.constant 0 : index
    %c0_4 = arith.constant 0 : index
    %3 = vector.load %arg4[%c0_3, %c0_4] : memref<1x128xf32, #tpu.memory_space<vmem>>, vector<1x128xf32>
    %4 = vector.broadcast %3 : vector<1x128xf32> to vector<64x128xf32>
    %5 = arith.addf %2, %4 : vector<64x128xf32>
    %c0_5 = arith.constant 0 : index
    %c0_6 = arith.constant 0 : index
    %6 = vector.load %arg5[%c0_5, %c0_6] : memref<64x128xf32, #tpu.memory_space<vmem>>, vector<64x128xf32>
    tpu.vector_store %arg5[%c0_5, %c0_6], %5 {strides = array<i32>} : memref<64x128xf32, #tpu.memory_space<vmem>>, vector<64x128xf32>,
    return
  }
  func.func @transform_0(%arg0: i32, %arg1: i32) -> (i32, i32) {
    %c0_i32 = arith.constant 0 : i32
    %c0_i32_0 = arith.constant 0 : i32
    return %arg0, %c0_i32 : i32, i32
  }
  func.func @transform_1(%arg0: i32, %arg1: i32) -> (i32, i32) {
    %c0_i32 = arith.constant 0 : i32
    %c0_i32_0 = arith.constant 0 : i32
    return %c0_i32, %arg1 : i32, i32
  }
  func.func @transform_2(%arg0: i32, %arg1: i32) -> (i32, i32) {
    %c0_i32 = arith.constant 0 : i32
    %c0_i32_0 = arith.constant 0 : i32
    return %c0_i32, %arg1 : i32, i32
  }
  func.func @transform_3(%arg0: i32, %arg1: i32) -> (i32, i32) {
    %c0_i32 = arith.constant 0 : i32
    return %arg0, %arg1 : i32, i32
  }
}

</mosaic_0001>

<llo_original>
// kernel: tpu_custom_call.1
$region0: #{tpu_custom_call.1}
  #allocation0 [shape = 'u32[]', space=smem, size = 0x4, offset = 0x4, fixed_abs, tag = 'smem constant byte address 0x4 - core index']
  #allocation1 [shape = 'u32[144,128]{1,0:T(1,128)}', space=vmem, size = 0x12000, scoped, tag = 'internal scratch']
  %s0 = inlined_call_operand.hbm [shape: f32[64,32], index: 0, kind: input, shape index: {}]
  %s1 = inlined_call_operand.hbm [shape: f32[32,128], index: 1, kind: input, shape index: {}]
  %s2 = inlined_call_operand.hbm [shape: f32[1,128], index: 2, kind: input, shape index: {}]
  %s3 = inlined_call_operand.hbm [shape: f32[64,128], index: 3, kind: output, shape index: {}]
  %s4 = sld [smem:[#allocation0]]
  $region34: #{tpu_custom_call.1} parent=0
    _
  %s6 = ssub.s32 1, %s4
  %s7 = scalar_select 0, %s6, %s4
  $region1: #{tpu_custom_call.1} parent=0
    #allocation2 [shape = 'u8[32768]{0}', space=vmem, size = 0x8000, scoped, tag = 'input window, operand 0, single buffered']
    #allocation3 [shape = 's32[1]{0}', space=sflag, size = 0x4, scoped, tag = 'scoped memory for tpu_custom_call.1']
    #allocation4 [shape = 's32[1]{0}', space=sflag, size = 0x4, scoped, tag = 'scoped memory for tpu_custom_call.1']
    #allocation5 [shape = 'u8[16384]{0}', space=vmem, size = 0x4000, scoped, tag = 'input window, operand 1, single buffered']
    #allocation6 [shape = 's32[1]{0}', space=sflag, size = 0x4, scoped, tag = 'scoped memory for tpu_custom_call.1']
    #allocation7 [shape = 'u8[512]{0}', space=vmem, size = 0x400, scoped, tag = 'input window, operand 2, single buffered']
    #allocation8 [shape = 'u8[32768]{0}', space=vmem, size = 0x8000, scoped, tag = 'output window, operand 0, single buffered']
    %8 = vsyncpa [#allocation3], 0
    %9 = vsyncpa [#allocation6], 0
    %10 = vsyncpa [#allocation4], 0
    // Predicated region
    $region2: #{tpu_custom_call.1} parent=1 // pred_check
      _
    $region3: #{tpu_custom_call.1} parent=1 // pred_check_branch
      %12 = sbr.rel (0) target = $region5
    $region4: #{tpu_custom_call.1} parent=1 // pred_region
      %s14 = ssub.s32 1024, 1024
      %15 = vsyncadd [#allocation3], %s14
      %s16 = sshll.u32 [#allocation2], 4
      %s17 = int_to_ptr.vmem [resolvable:$true] %s16
      %22 = dma.hbm_to_vmem [thread:$0]  %s0, 1024, %s17, [#allocation3], 128, 128, 8
    $region5: #{tpu_custom_call.1} parent=1 // pred_fallthru
      _
    // Predicated region
    $region6: #{tpu_custom_call.1} parent=1 // pred_check
      _
    $region7: #{tpu_custom_call.1} parent=1 // pred_check_branch
      %24 = sbr.rel (0) target = $region9
    $region8: #{tpu_custom_call.1} parent=1 // pred_region
      %s26 = ssub.s32 512, 512
      %27 = vsyncadd [#allocation6], %s26
      %s28 = sshll.u32 [#allocation5], 4
      %s29 = int_to_ptr.vmem [resolvable:$true] %s28
      %34 = dma.hbm_to_vmem [thread:$0]  %s1, 512, %s29, [#allocation6], 128, 128, 8
    $region9: #{tpu_custom_call.1} parent=1 // pred_fallthru
      _
    // Predicated region
    $region10: #{tpu_custom_call.1} parent=1 // pred_check
      _
    $region11: #{tpu_custom_call.1} parent=1 // pred_check_branch
      %36 = sbr.rel (0) target = $region13
    $region12: #{tpu_custom_call.1} parent=1 // pred_region
      %s38 = ssub.s32 16, 16
      %39 = vsyncadd [#allocation6], %s38
      %s41 = sshll.u32 [#allocation7], 4
      %s42 = int_to_ptr.vmem [resolvable:$true] %s41
      %44 = dma.hbm_to_vmem [thread:$0]  %s2, 16, %s42, [#allocation6]
    $region13: #{tpu_custom_call.1} parent=1 // pred_fallthru
      _
    // Predicated region
    $region14: #{tpu_custom_call.1} parent=1 // pred_check
      _
    $region15: #{tpu_custom_call.1} parent=1 // pred_check_branch
      %46 = sbr.rel (0) target = $region17
    $region16: #{tpu_custom_call.1} parent=1 // pred_region
      %47 = dma.done [#allocation3], 1024
    $region17: #{tpu_custom_call.1} parent=1 // pred_fallthru
      _
    // Predicated region
    $region18: #{tpu_custom_call.1} parent=1 // pred_check
      _
    $region19: #{tpu_custom_call.1} parent=1 // pred_check_branch
      %49 = sbr.rel (0) target = $region21
    $region20: #{tpu_custom_call.1} parent=1 // pred_region
      %50 = dma.done [#allocation6], 512
    $region21: #{tpu_custom_call.1} parent=1 // pred_fallthru
      _
    // Predicated region
    $region22: #{tpu_custom_call.1} parent=1 // pred_check
      _
    $region23: #{tpu_custom_call.1} parent=1 // pred_check_branch
      %52 = sbr.rel (0) target = $region25
    $region24: #{tpu_custom_call.1} parent=1 // pred_region
      %53 = dma.done [#allocation6], 16
    $region25: #{tpu_custom_call.1} parent=1 // pred_fallthru
      _
    %v54 = vld [vmem:[#allocation2] sm:$0xff]
    %v55 = vld [vmem:[#allocation2 + $0x8] sm:$0xff]
    %v56 = vld [vmem:[#allocation2 + $0x10] sm:$0xff]
    %v57 = vld [vmem:[#allocation2 + $0x18] sm:$0xff]
    %v58 = vld [vmem:[#allocation2 + $0x20] sm:$0xff]
    %v59 = vld [vmem:[#allocation2 + $0x28] sm:$0xff]
    %v60 = vld [vmem:[#allocation2 + $0x30] sm:$0xff]
    %v61 = vld [vmem:[#allocation2 + $0x38] sm:$0xff]
    %v62 = vld [vmem:[#allocation5] sm:$0xff]
    %v63 = vld [vmem:[#allocation5 + $0x8] sm:$0xff]
    %v64 = vld [vmem:[#allocation5 + $0x10] sm:$0xff]
    %v65 = vld [vmem:[#allocation5 + $0x18] sm:$0xff]
    %v66 = vld [vmem:[#allocation7] sm:$0x1]
    %v68 = vlaneseq
    %v69 = vshrl.u32 %v68, 7
    %v70 = vsub.s32 0, %v69
    %v71 = vrot.slane %v66, %v70
    %vm73 = vcmask 261120
    %v75 = vsel %vm73, %v54, 0
    %v78 = vsel %vm73, %v55, 0
    %v81 = vsel %vm73, %v56, 0
    %v84 = vsel %vm73, %v57, 0
    %v87 = vsel %vm73, %v58, 0
    %v90 = vsel %vm73, %v59, 0
    %v93 = vsel %vm73, %v60, 0
    %v96 = vsel %vm73, %v61, 0
    %98 = vmatprep.subr.mxu0 0.0
    %99 = vmatpush1.msra.mxu0 %v62
    %100 = vmatprep.subr.mxu0 0.0
    %101 = vmatpush1.msra.mxu0 %v63
    %102 = vmatprep.subr.mxu0 0.0
    %103 = vmatpush1.msra.mxu0 %v64
    %104 = vmatprep.subr.mxu0 0.0
    %105 = vmatpush1.msra.mxu0 %v65
    %106 = vmatprep.subr.mxu0 0.0
    %107 = vmatpush1.msra.mxu0 0.0
    %108 = vmatprep.subr.mxu0 0.0
    %109 = vmatpush1.msra.mxu0 0.0
    %110 = vmatprep.subr.mxu0 0.0
    %111 = vmatpush1.msra.mxu0 0.0
    %112 = vmatprep.subr.mxu0 0.0
    %113 = vmatpush1.msra.mxu0 0.0
    %114 = vmatprep.subr.mxu0 0.0
    %115 = vmatpush1.msra.mxu0 0.0
    %116 = vmatprep.subr.mxu0 0.0
    %117 = vmatpush1.msra.mxu0 0.0
    %118 = vmatprep.subr.mxu0 0.0
    %119 = vmatpush1.msra.mxu0 0.0
    %120 = vmatprep.subr.mxu0 0.0
    %121 = vmatpush1.msra.mxu0 0.0
    %122 = vmatprep.subr.mxu0 0.0
    %123 = vmatpush1.msra.mxu0 0.0
    %124 = vmatprep.subr.mxu0 0.0
    %125 = vmatpush1.msra.mxu0 0.0
    %126 = vmatprep.subr.mxu0 0.0
    %127 = vmatpush1.msra.mxu0 0.0
    %128 = vmatprep.subr.mxu0 0.0
    %129 = vmatpush1.msra.mxu0 0.0
    %130 = vmatprep.subr.mxu0 0.0
    %131 = vmatpush1.msra.mxu0 0.0
    %132 = vmatprep.subr.mxu0 0.0
    %133 = vmatpush1.msra.mxu0 0.0
    %134 = vmatprep.subr.mxu0 0.0
    %135 = vmatpush1.msra.mxu0 0.0
    %136 = vmatprep.subr.mxu0 0.0
    %137 = vmatpush1.msra.mxu0 0.0
    %138 = vmatprep.subr.mxu0 0.0
    %139 = vmatpush1.msra.mxu0 0.0
    %140 = vmatprep.subr.mxu0 0.0
    %141 = vmatpush1.msra.mxu0 0.0
    %142 = vmatprep.subr.mxu0 0.0
    %143 = vmatpush1.msra.mxu0 0.0
    %144 = vmatprep.subr.mxu0 0.0
    %145 = vmatpush1.msra.mxu0 0.0
    %146 = vmatprep.subr.mxu0 0.0
    %147 = vmatpush1.msra.mxu0 0.0
    %148 = vmatprep.subr.mxu0 0.0
    %149 = vmatpush1.msra.mxu0 0.0
    %150 = vmatprep.subr.mxu0 0.0
    %151 = vmatpush1.msra.mxu0 0.0
    %152 = vmatprep.subr.mxu0 0.0
    %153 = vmatpush1.msra.mxu0 0.0
    %154 = vmatprep.subr.mxu0 0.0
    %155 = vmatpush1.msra.mxu0 0.0
    %156 = vmatprep.subr.mxu0 0.0
    %157 = vmatpush1.msra.mxu0 0.0
    %158 = vmatprep.subr.mxu0 0.0
    %159 = vmatpush1.msra.mxu0 0.0
    %160 = vmatprep.subr.mxu0 0.0
    %161 = vmatpush1.msra.mxu0 0.0
    %162 = vmatprep.mubr.f32.mxu0 0.0
    %163 = vmatmul.mubr.f32.gmra.mrb[0].mxu0 %v75
    %v164 = vpop.f32.mrb[0].mxu0
    %v165 = vadd.f32 %v71, %v164
    %v166 = vpop.f32.mrb[0].mxu0
    %167 = vmatprep.mubr.f32.mxu0 0.0
    %168 = vmatmul.mubr.f32.gmra.mrb[0].mxu0 %v78
    %v169 = vpop.f32.mrb[0].mxu0
    %v170 = vadd.f32 %v71, %v169
    %v171 = vpop.f32.mrb[0].mxu0
    %172 = vmatprep.mubr.f32.mxu0 0.0
    %173 = vmatmul.mubr.f32.gmra.mrb[0].mxu0 %v81
    %v174 = vpop.f32.mrb[0].mxu0
    %v175 = vadd.f32 %v71, %v174
    %v176 = vpop.f32.mrb[0].mxu0
    %177 = vmatprep.mubr.f32.mxu0 0.0
    %178 = vmatmul.mubr.f32.gmra.mrb[0].mxu0 %v84
    %v179 = vpop.f32.mrb[0].mxu0
    %v180 = vadd.f32 %v71, %v179
    %v181 = vpop.f32.mrb[0].mxu0
    %182 = vmatprep.mubr.f32.mxu0 0.0
    %183 = vmatmul.mubr.f32.gmra.mrb[0].mxu0 %v87
    %v184 = vpop.f32.mrb[0].mxu0
    %v185 = vadd.f32 %v71, %v184
    %v186 = vpop.f32.mrb[0].mxu0
    %187 = vmatprep.mubr.f32.mxu0 0.0
    %188 = vmatmul.mubr.f32.gmra.mrb[0].mxu0 %v90
    %v189 = vpop.f32.mrb[0].mxu0
    %v190 = vadd.f32 %v71, %v189
    %v191 = vpop.f32.mrb[0].mxu0
    %192 = vmatprep.mubr.f32.mxu0 0.0
    %193 = vmatmul.mubr.f32.gmra.mrb[0].mxu0 %v93
    %v194 = vpop.f32.mrb[0].mxu0
    %v195 = vadd.f32 %v71, %v194
    %v196 = vpop.f32.mrb[0].mxu0
    %197 = vmatprep.mubr.f32.mxu0 0.0
    %198 = vmatmul.mubr.f32.gmra.mrb[0].mxu0 %v96
    %v199 = vpop.f32.mrb[0].mxu0
    %v200 = vadd.f32 %v71, %v199
    %v201 = vpop.f32.mrb[0].mxu0
    %202 = vdwg.mxu0
    %203 = vst [vmem:[#allocation8] sm:$0xff] %v165
    %204 = vst [vmem:[#allocation8 + $0x8] sm:$0xff] %v170
    %205 = vst [vmem:[#allocation8 + $0x10] sm:$0xff] %v175
    %206 = vst [vmem:[#allocation8 + $0x18] sm:$0xff] %v180
    %207 = vst [vmem:[#allocation8 + $0x20] sm:$0xff] %v185
    %208 = vst [vmem:[#allocation8 + $0x28] sm:$0xff] %v190
    %209 = vst [vmem:[#allocation8 + $0x30] sm:$0xff] %v195
    %210 = vst [vmem:[#allocation8 + $0x38] sm:$0xff] %v200
    // Predicated region
    $region26: #{tpu_custom_call.1} parent=1 // pred_check
      _
    $region27: #{tpu_custom_call.1} parent=1 // pred_check_branch
      %212 = sbr.rel (0) target = $region29
    $region28: #{tpu_custom_call.1} parent=1 // pred_region
      %s214 = ssub.s32 1024, 1024
      %215 = vsyncadd [#allocation4], %s214
      %s216 = sshll.u32 [#allocation8], 4
      %s217 = int_to_ptr.vmem [resolvable:$true] %s216
      %222 = dma.vmem_to_hbm [thread:$0]  %s217, 1024, %s3, [#allocation4], 128, 128, 8
    $region29: #{tpu_custom_call.1} parent=1 // pred_fallthru
      _
    // Predicated region
    $region30: #{tpu_custom_call.1} parent=1 // pred_check
      _
    $region31: #{tpu_custom_call.1} parent=1 // pred_check_branch
      %224 = sbr.rel (0) target = $region33
    $region32: #{tpu_custom_call.1} parent=1 // pred_region
      %225 = dma.done [#allocation4], 1024
    $region33: #{tpu_custom_call.1} parent=1 // pred_fallthru
      _
    %226 = vsyncpa [#allocation3], 1
    %227 = vsyncpa [#allocation6], 1
    %228 = vsyncpa [#allocation4], 1

</llo_original>
